<compile_context>
chip_gen: v7x
topology: tpu7x:2x2x1
jax: 0.10.0
libtpu: 0.0.40
codegen_flags: <defaults>
</compile_context>

<pallas_src>
import math

import jax
import jax.numpy as jnp
from jax.experimental import pallas as pl
from jax.experimental.pallas import tpu as pltpu

LANE = 128
DIM_C = 16
DIM_B = 8
TECH_IB_COEF = 4        # default (no 'tech_ib_*' experiment)
S_COEF = 1000           # default (no 's_coef_*' experiment)
MOD_COEF = 50.0         # default (no 'mod_*' experiment)
NEG_BIG = -1.0e9        # finite pad for CE logit lanes (exp underflows to 0, no inf/nan)
LOG_2PI = math.log(2.0 * math.pi)


def _rup(v, m):
    return -(-v // m) * m


def _width(d):
    return _rup(d, LANE)


# ---------------------------------------------------------------------------
# elementwise loss helpers (used inside the kernel and by the JAX reference)
# ---------------------------------------------------------------------------
def _poisson_nll_full(pred_log, target):
    # torch.nn.PoissonNLLLoss(log_input=True, full=True, reduction='none')
    base = jnp.exp(pred_log) - target * pred_log
    safe_t = jnp.where(target > 1.0, target, 2.0)      # avoid log(0) in dead branch
    logt = jnp.log(safe_t)                              # reused: 2 EUP ops, not 3
    stirling = safe_t * logt - safe_t + 0.5 * (LOG_2PI + logt)
    return base + jnp.where(target > 1.0, stirling, 0.0)


def _bce(pred_prob, target):
    # torch.nn.BCELoss(reduction='none'): log terms clamped at -100
    logp = jnp.maximum(jnp.log(pred_prob), -100.0)
    log1mp = jnp.maximum(jnp.log1p(-pred_prob), -100.0)
    return -(target * logp + (1.0 - target) * log1mp)


def _kld_sum(mu, logvar):
    return jnp.sum(-0.5 * (1.0 + logvar - mu * mu - jnp.exp(logvar)))


# ---------------------------------------------------------------------------
# fused Pallas kernel: per-tile (8, 128) partial sums from 3 lean slabs
# ---------------------------------------------------------------------------
def _make_loss_kernel(meta, z_info, tile_rows, mod_coef):
    """All section offsets / widths in `meta` and `z_info` are static Python ints."""

    def _fold(acc, contrib):
        # fold a (T, k*128) contribution into the single (T, 128) accumulator
        for j in range(0, contrib.shape[1], LANE):
            acc = acc + contrib[:, j:j + LANE]
        return acc

    def kernel(a_ref, b_ref, w_ref, out_ref):
        T = tile_rows
        acc = jnp.zeros((T, LANE), jnp.float32)

        for sec in meta:
            kind, ao, bo, wo, width = (sec['kind'], sec['a_off'], sec['b_off'],
                                       sec['w_off'], sec['width'])
            if kind == 'pois':
                # fold per 128-lane chunk: keeps live vregs bounded and lets Mosaic
                # overlap chunk i+1 loads under chunk i EUP latency.
                for j in range(0, width, LANE):
                    pred = a_ref[:, ao + j: ao + j + LANE]
                    tgt = b_ref[:, bo + j: bo + j + LANE]
                    msk = w_ref[:, wo + j: wo + j + LANE]
                    acc = acc + msk * _poisson_nll_full(pred, tgt)
            elif kind == 'bce':
                # pad lanes/rows have pred=target=0 -> exactly 0 loss (log clamp)
                for j in range(0, width, LANE):
                    p = a_ref[:, ao + j: ao + j + LANE]
                    t = b_ref[:, bo + j: bo + j + LANE]
                    acc = acc + _bce(p, t)
            elif kind == 'kld':
                # static per-lane weights generated in-kernel (1 for c-dims,
                # 1 + tech_ib for b-dims; pad lanes contribute 0 regardless).
                for j in range(0, width, LANE):
                    mu = a_ref[:, ao + j: ao + j + LANE]
                    lv = b_ref[:, bo + j: bo + j + LANE]
                    lane = jax.lax.broadcasted_iota(jnp.int32, (T, LANE), 1) + j
                    wt = jnp.where(lane < DIM_C, 1.0, 1.0 + TECH_IB_COEF)
                    acc = acc + wt * (-0.5 * (1.0 + lv - mu * mu - jnp.exp(lv)))
            elif kind == 'ce':
                logits = a_ref[:, ao: ao + width]     # pad lanes hold NEG_BIG
                onehot = b_ref[:, bo: bo + width]     # coef-scaled one-hot (0 on pads)
                m = jnp.max(logits, axis=-1, keepdims=True)
                lse = jnp.log(jnp.sum(jnp.exp(logits - m), axis=-1, keepdims=True)) + m
                acc = _fold(acc, onehot * (lse - logits))

        # ---- modality-alignment loss on z_uni -------------------------------
        if z_info['mode'] == 'packed':
            # all M latents live in one 128-lane chunk at lane offsets m*dc; the
            # cross-modality sum is built lane-dense with symmetric XLU rolls
            # (wrapped-in lanes are guaranteed pads because (2M-1)*dc <= 128).
            base, M, dc = z_info['base'], z_info['count'], z_info['dim']
            chunk = a_ref[:, base: base + LANE]
            zsum = chunk
            for k in range(1, M):
                zsum = zsum + pltpu.roll(chunk, (k * dc) % LANE, axis=1)
                zsum = zsum + pltpu.roll(chunk, (LANE - k * dc) % LANE, axis=1)
            zbar = zsum * (1.0 / M)
            lane = jax.lax.broadcasted_iota(jnp.int32, (T, LANE), 1)
            diff = jnp.where(lane < M * dc, chunk - zbar, 0.0)
            acc = acc + mod_coef * diff * diff
        else:
            # fallback: one 128-aligned section per modality (pad lanes are 0)
            zs = [a_ref[:, o: o + w] for o, w in z_info['secs']]
            zbar = sum(zs) * (1.0 / float(len(zs)))
            contrib = sum((z - zbar) ** 2 for z in zs) * mod_coef
            acc = _fold(acc, contrib)

        # fold T rows -> 8 sublanes; the final cross-lane/tile sum is left to XLA.
        part = acc[0:8, :]
        for r in range(8, T, 8):
            part = part + acc[r:r + 8, :]
        out_ref[...] = part

    return kernel


# ---------------------------------------------------------------------------
# host-side packing + pallas_call wrapper
# ---------------------------------------------------------------------------
def _place(arr, n_pad, width, pad_val=0.0):
    arr = jnp.asarray(arr, jnp.float32)
    n, d = arr.shape
    out = jnp.full((n_pad, width), pad_val, jnp.float32)
    return out.at[:n, :d].set(arr)


def loss_calculator(x, e, s, x_r_pre, s_r_pre, z_mu, z_logvar, z_uni):
    """JAX wrapper mirroring LossCalculator.forward (arg `b` is unused there)."""
    n = s.shape[0]

    # -------- static section layout (plain Python ints) ----------------------
    # A slab: predictions / first operands;  B slab: targets (only where needed);
    # W slab: only the Poisson `e` element masks.
    secs = []
    a_w = b_w = w_w = 0

    def new_sec(kind, d, has_b, has_w, **extra):
        nonlocal a_w, b_w, w_w
        width = _width(d)
        secs.append(dict(kind=kind, d=d, width=width, a_off=a_w,
                         b_off=b_w if has_b else None,
                         w_off=w_w if has_w else None, **extra))
        a_w += width
        b_w += width if has_b else 0
        w_w += width if has_w else 0

    new_sec('pois', x_r_pre['rna'].shape[1], True, True, mod='rna')
    new_sec('pois', x_r_pre['adt'].shape[1], True, True, mod='adt')
    new_sec('bce', x_r_pre['atac'].shape[1], True, False, mod='atac')
    new_sec('kld', z_mu.shape[1], True, False)
    new_sec('ce', x_r_pre['label'].shape[1], True, False, which='label')
    new_sec('ce', s_r_pre.shape[1], True, False, which='s')

    z_list = [jnp.asarray(zm, jnp.float32) for zm in z_uni.values()]
    n_mod = len(z_list)
    dc = z_list[0].shape[1]
    assert all(zm.shape[1] == dc for zm in z_list)
    if (2 * n_mod - 1) * dc <= LANE:
        z_info = dict(mode='packed', base=a_w, count=n_mod, dim=dc)
        a_w += LANE
    else:
        wz = _width(dc)
        z_info = dict(mode='split',
                      secs=tuple((a_w + i * wz, wz) for i in range(n_mod)))
        a_w += n_mod * wz

    # -------- row tile from a v7x-safe (~16 MiB double-buffered) VMEM budget --
    bytes_per_row = 4 * (a_w + b_w + w_w)
    budget = 16 * 1024 * 1024
    t_max = min(512, max(8, (budget // (2 * bytes_per_row)) // 8 * 8))
    tile = min(t_max, _rup(n, 8))
    n_pad = _rup(n, tile)
    grid_n = n_pad // tile

    # -------- pack the three lean slabs --------------------------------------
    a_parts, b_parts, w_parts = [], [], []
    for sec in secs:
        kind, width = sec['kind'], sec['width']
        if kind == 'pois':
            m = sec['mod']
            a_parts.append(_place(x_r_pre[m], n_pad, width))
            b_parts.append(_place(x[m], n_pad, width))
            w_parts.append(_place(e[m], n_pad, width))
        elif kind == 'bce':
            m = sec['mod']
            a_parts.append(_place(x_r_pre[m], n_pad, width))
            b_parts.append(_place(x[m], n_pad, width))
        elif kind == 'kld':
            a_parts.append(_place(z_mu, n_pad, width))
            b_parts.append(_place(z_logvar, n_pad, width))
        else:   # 'ce' -- int labels folded into a coef-scaled one-hot (no int32 tile)
            if sec['which'] == 'label':
                logits, labels, coef = x_r_pre['label'], x['label'][:, 0], 1.0
            else:
                logits, labels, coef = s_r_pre, s[:, 0], float(TECH_IB_COEF + S_COEF)
            onehot = jax.nn.one_hot(labels, sec['d'], dtype=jnp.float32) * coef
            a_parts.append(_place(logits, n_pad, width, pad_val=NEG_BIG))
            b_parts.append(_place(onehot, n_pad, width))

    if z_info['mode'] == 'packed':
        zbuf = jnp.zeros((n_pad, LANE), jnp.float32)
        for i, zm in enumerate(z_list):
            zbuf = zbuf.at[:n, i * dc:(i + 1) * dc].set(zm)
        a_parts.append(zbuf)
    else:
        for zm in z_list:
            a_parts.append(_place(zm, n_pad, _width(dc)))

    # TODO(synk): for production MIDAS widths (thousands of RNA/ATAC features) pass the
    # wide modalities (and their e masks) as standalone lane-dense operands (or use
    # CompilerParams(allow_input_fusion)) instead of this host-side repack, and
    # optionally ship A/B payloads as bf16 (keep Poisson count targets in f32).
    a = jnp.concatenate(a_parts, axis=1)
    b = jnp.concatenate(b_parts, axis=1)
    w = jnp.concatenate(w_parts, axis=1)
    assert a.shape[1] == a_w and b.shape[1] == b_w and w.shape[1] == w_w

    kernel = _make_loss_kernel(tuple(secs), z_info, tile, MOD_COEF)

    vmem_limit = int(min(60 << 20, 2 * tile * bytes_per_row + (16 << 20)))
    partials = pl.pallas_call(
        kernel,
        out_shape=jax.ShapeDtypeStruct((grid_n * 8, LANE), jnp.float32),
        grid=(grid_n,),
        in_specs=[
            pl.BlockSpec((tile, a_w), lambda i: (i, 0)),
            pl.BlockSpec((tile, b_w), lambda i: (i, 0)),
            pl.BlockSpec((tile, w_w), lambda i: (i, 0)),
        ],
        out_specs=pl.BlockSpec((8, LANE), lambda i: (i, 0)),
        compiler_params=pltpu.CompilerParams(
            dimension_semantics=("parallel",),
            vmem_limit_bytes=vmem_limit),
    )(a, b, w)

    return jnp.sum(partials) / jnp.float32(n)


# ---------------------------------------------------------------------------
# pure-JAX reference (mirrors the PyTorch semantics) for a correctness check
# ---------------------------------------------------------------------------
def reference_loss(x, e, s, x_r_pre, s_r_pre, z_mu, z_logvar, z_uni):
    n = s.shape[0]

    def ce_sum(logits, labels):
        logp = jax.nn.log_softmax(logits, axis=-1)
        return -jnp.sum(jnp.take_along_axis(logp, labels.astype(jnp.int32), axis=-1))

    recon = jnp.sum(_poisson_nll_full(x_r_pre['rna'], x['rna']) * e['rna'])
    recon += jnp.sum(_poisson_nll_full(x_r_pre['adt'], x['adt']) * e['adt'])
    recon += jnp.sum(_bce(x_r_pre['atac'], x['atac']))
    recon += ce_sum(x_r_pre['label'], x['label'])
    recon += ce_sum(s_r_pre, s) * (TECH_IB_COEF + S_COEF)
    loss_recon = recon / n

    kld_c = _kld_sum(z_mu[:, :DIM_C], z_logvar[:, :DIM_C]) / n
    kld_b = _kld_sum(z_mu[:, DIM_C:], z_logvar[:, DIM_C:]) / n
    loss_kld_z = kld_c + (1 + TECH_IB_COEF) * kld_b

    zs = jnp.stack(list(z_uni.values()), axis=0)
    loss_mod = jnp.sum((zs - zs.mean(0, keepdims=True)) ** 2) / n * MOD_COEF
    return loss_recon + loss_kld_z + loss_mod


if __name__ == "__main__":
    key = jax.random.PRNGKey(0)
    ks = jax.random.split(key, 16)

    N = 8
    D_RNA, D_ADT, D_ATAC = 32, 16, 32
    C_LABEL, C_BATCH = 4, 3
    M_MODS = 3

    x = {
        'rna': jnp.floor(jax.random.uniform(ks[0], (N, D_RNA)) * 5.0),       # counts
        'adt': jnp.floor(jax.random.uniform(ks[1], (N, D_ADT)) * 5.0),       # counts
        'atac': jax.random.bernoulli(ks[2], 0.3, (N, D_ATAC)).astype(jnp.float32),
        'label': jax.random.randint(ks[3], (N, 1), 0, C_LABEL, dtype=jnp.int32),
    }
    e = {
        'rna': jax.random.bernoulli(ks[4], 0.9, (N, D_RNA)).astype(jnp.float32),
        'adt': jax.random.bernoulli(ks[5], 0.9, (N, D_ADT)).astype(jnp.float32),
    }
    s = jax.random.randint(ks[6], (N, 1), 0, C_BATCH, dtype=jnp.int32)

    x_r_pre = {
        'rna': 0.1 * jax.random.normal(ks[7], (N, D_RNA)),                   # log-rates
        'adt': 0.1 * jax.random.normal(ks[8], (N, D_ADT)),                   # log-rates
        'atac': jax.nn.sigmoid(jax.random.normal(ks[9], (N, D_ATAC))),       # probs
        'label': jax.random.normal(ks[10], (N, C_LABEL)),                    # logits
    }
    s_r_pre = jax.random.normal(ks[11], (N, C_BATCH))                        # logits
    z_mu = jax.random.normal(ks[12], (N, DIM_C + DIM_B))
    z_logvar = 0.1 * jax.random.normal(ks[13], (N, DIM_C + DIM_B))
    z_uni = {
        f'mod{i}': jax.random.normal(jax.random.fold_in(ks[14], i), (N, DIM_C))
        for i in range(M_MODS)
    }

    out = loss_calculator(x, e, s, x_r_pre, s_r_pre, z_mu, z_logvar, z_uni)
    out = jax.block_until_ready(out)

    ref = reference_loss(x, e, s, x_r_pre, s_r_pre, z_mu, z_logvar, z_uni)
    assert abs(float(out) - float(ref)) <= 1e-2 + 1e-3 * abs(float(ref)), (float(out), float(ref))
    print("KERNEL_OK")
</pallas_src>

<mosaic_0001>
module attributes {stable_mosaic.version = 11 : i64} {
  func.func @kernel(%arg0: i32, %arg1: memref<8x896xf32, #tpu.memory_space<vmem>>, %arg2: memref<8x768xf32, #tpu.memory_space<vmem>>, %arg3: memref<8x256xf32, #tpu.memory_space<vmem>>, %arg4: memref<8x128xf32, #tpu.memory_space<vmem>>) attributes {dimension_semantics = [#tpu.dimension_semantics<parallel>], iteration_bounds = array<i64: 1>, scalar_prefetch = 0 : i64, scratch_operands = 0 : i64, tpu.core_type = #tpu.core_type<tc>, window_params = [{transform_indices = @transform_0, window_bounds = array<i64: 8, 896>}, {transform_indices = @transform_1, window_bounds = array<i64: 8, 768>}, {transform_indices = @transform_2, window_bounds = array<i64: 8, 256>}, {transform_indices = @transform_3, window_bounds = array<i64: 8, 128>}]} {
    %cst = arith.constant 0.000000e+00 : f32
    %0 = vector.broadcast %cst : f32 to vector<8x128xf32>
    %c0 = arith.constant 0 : index
    %c0_0 = arith.constant 0 : index
    %1 = vector.load %arg1[%c0, %c0_0] : memref<8x896xf32, #tpu.memory_space<vmem>>, vector<8x128xf32>
    %c0_1 = arith.constant 0 : index
    %c0_2 = arith.constant 0 : index
    %2 = vector.load %arg2[%c0_1, %c0_2] : memref<8x768xf32, #tpu.memory_space<vmem>>, vector<8x128xf32>
    %c0_3 = arith.constant 0 : index
    %c0_4 = arith.constant 0 : index
    %3 = vector.load %arg3[%c0_3, %c0_4] : memref<8x256xf32, #tpu.memory_space<vmem>>, vector<8x128xf32>
    %4 = math.exp %1 : vector<8x128xf32>
    %5 = arith.mulf %2, %1 : vector<8x128xf32>
    %6 = arith.subf %4, %5 : vector<8x128xf32>
    %cst_5 = arith.constant 1.000000e+00 : f32
    %7 = vector.broadcast %cst_5 : f32 to vector<8x128xf32>
    %8 = arith.cmpf ogt, %2, %7 : vector<8x128xf32>
    %cst_6 = arith.constant 2.000000e+00 : f32
    %9 = vector.broadcast %cst_6 : f32 to vector<8x128xf32>
    %10 = arith.select %8, %2, %9 : vector<8x128xi1>, vector<8x128xf32>
    %11 = math.log %10 : vector<8x128xf32>
    %12 = arith.mulf %10, %11 : vector<8x128xf32>
    %13 = arith.subf %12, %10 : vector<8x128xf32>
    %cst_7 = arith.constant 1.83787704 : f32
    %14 = vector.broadcast %cst_7 : f32 to vector<8x128xf32>
    %15 = arith.addf %14, %11 : vector<8x128xf32>
    %cst_8 = arith.constant 5.000000e-01 : f32
    %16 = vector.broadcast %cst_8 : f32 to vector<8x128xf32>
    %17 = arith.mulf %16, %15 : vector<8x128xf32>
    %18 = arith.addf %13, %17 : vector<8x128xf32>
    %cst_9 = arith.constant 1.000000e+00 : f32
    %19 = vector.broadcast %cst_9 : f32 to vector<8x128xf32>
    %20 = arith.cmpf ogt, %2, %19 : vector<8x128xf32>
    %cst_10 = arith.constant 0.000000e+00 : f32
    %21 = vector.broadcast %cst_10 : f32 to vector<8x128xf32>
    %22 = arith.select %20, %18, %21 : vector<8x128xi1>, vector<8x128xf32>
    %23 = arith.addf %6, %22 : vector<8x128xf32>
    %24 = arith.mulf %3, %23 : vector<8x128xf32>
    %25 = arith.addf %0, %24 : vector<8x128xf32>
    %c0_11 = arith.constant 0 : index
    %c128 = arith.constant 128 : index
    %26 = vector.load %arg1[%c0_11, %c128] : memref<8x896xf32, #tpu.memory_space<vmem>>, vector<8x128xf32>
    %c0_12 = arith.constant 0 : index
    %c128_13 = arith.constant 128 : index
    %27 = vector.load %arg2[%c0_12, %c128_13] : memref<8x768xf32, #tpu.memory_space<vmem>>, vector<8x128xf32>
    %c0_14 = arith.constant 0 : index
    %c128_15 = arith.constant 128 : index
    %28 = vector.load %arg3[%c0_14, %c128_15] : memref<8x256xf32, #tpu.memory_space<vmem>>, vector<8x128xf32>
    %29 = math.exp %26 : vector<8x128xf32>
    %30 = arith.mulf %27, %26 : vector<8x128xf32>
    %31 = arith.subf %29, %30 : vector<8x128xf32>
    %cst_16 = arith.constant 1.000000e+00 : f32
    %32 = vector.broadcast %cst_16 : f32 to vector<8x128xf32>
    %33 = arith.cmpf ogt, %27, %32 : vector<8x128xf32>
    %cst_17 = arith.constant 2.000000e+00 : f32
    %34 = vector.broadcast %cst_17 : f32 to vector<8x128xf32>
    %35 = arith.select %33, %27, %34 : vector<8x128xi1>, vector<8x128xf32>
    %36 = math.log %35 : vector<8x128xf32>
    %37 = arith.mulf %35, %36 : vector<8x128xf32>
    %38 = arith.subf %37, %35 : vector<8x128xf32>
    %cst_18 = arith.constant 1.83787704 : f32
    %39 = vector.broadcast %cst_18 : f32 to vector<8x128xf32>
    %40 = arith.addf %39, %36 : vector<8x128xf32>
    %cst_19 = arith.constant 5.000000e-01 : f32
    %41 = vector.broadcast %cst_19 : f32 to vector<8x128xf32>
    %42 = arith.mulf %41, %40 : vector<8x128xf32>
    %43 = arith.addf %38, %42 : vector<8x128xf32>
    %cst_20 = arith.constant 1.000000e+00 : f32
    %44 = vector.broadcast %cst_20 : f32 to vector<8x128xf32>
    %45 = arith.cmpf ogt, %27, %44 : vector<8x128xf32>
    %cst_21 = arith.constant 0.000000e+00 : f32
    %46 = vector.broadcast %cst_21 : f32 to vector<8x128xf32>
    %47 = arith.select %45, %43, %46 : vector<8x128xi1>, vector<8x128xf32>
    %48 = arith.addf %31, %47 : vector<8x128xf32>
    %49 = arith.mulf %28, %48 : vector<8x128xf32>
    %50 = arith.addf %25, %49 : vector<8x128xf32>
    %c0_22 = arith.constant 0 : index
    %c256 = arith.constant 256 : index
    %51 = vector.load %arg1[%c0_22, %c256] : memref<8x896xf32, #tpu.memory_space<vmem>>, vector<8x128xf32>
    %c0_23 = arith.constant 0 : index
    %c256_24 = arith.constant 256 : index
    %52 = vector.load %arg2[%c0_23, %c256_24] : memref<8x768xf32, #tpu.memory_space<vmem>>, vector<8x128xf32>
    %53 = math.log %51 : vector<8x128xf32>
    %cst_25 = arith.constant -1.000000e+02 : f32
    %54 = vector.broadcast %cst_25 : f32 to vector<8x128xf32>
    %55 = arith.maximumf %53, %54 : vector<8x128xf32>
    %cst_26 = arith.constant 0.000000e+00 : f32
    %56 = vector.broadcast %cst_26 : f32 to vector<8x128xf32>
    %57 = arith.subf %56, %51 : vector<8x128xf32>
    %58 = math.log1p %57 : vector<8x128xf32>
    %cst_27 = arith.constant -1.000000e+02 : f32
    %59 = vector.broadcast %cst_27 : f32 to vector<8x128xf32>
    %60 = arith.maximumf %58, %59 : vector<8x128xf32>
    %61 = arith.mulf %52, %55 : vector<8x128xf32>
    %cst_28 = arith.constant 1.000000e+00 : f32
    %62 = vector.broadcast %cst_28 : f32 to vector<8x128xf32>
    %63 = arith.subf %62, %52 : vector<8x128xf32>
    %64 = arith.mulf %63, %60 : vector<8x128xf32>
    %65 = arith.addf %61, %64 : vector<8x128xf32>
    %cst_29 = arith.constant 0.000000e+00 : f32
    %66 = vector.broadcast %cst_29 : f32 to vector<8x128xf32>
    %67 = arith.subf %66, %65 : vector<8x128xf32>
    %68 = arith.addf %50, %67 : vector<8x128xf32>
    %c0_30 = arith.constant 0 : index
    %c384 = arith.constant 384 : index
    %69 = vector.load %arg1[%c0_30, %c384] : memref<8x896xf32, #tpu.memory_space<vmem>>, vector<8x128xf32>
    %c0_31 = arith.constant 0 : index
    %c384_32 = arith.constant 384 : index
    %70 = vector.load %arg2[%c0_31, %c384_32] : memref<8x768xf32, #tpu.memory_space<vmem>>, vector<8x128xf32>
    %71 = tpu.iota {dimensions = array<i32: 1>} : vector<8x128xi32>
    %c0_i32 = arith.constant 0 : i32
    %72 = vector.broadcast %c0_i32 : i32 to vector<8x128xi32>
    %73 = arith.addi %71, %72 : vector<8x128xi32>
    %c16_i32 = arith.constant 16 : i32
    %74 = vector.broadcast %c16_i32 : i32 to vector<8x128xi32>
    %75 = arith.cmpi slt, %73, %74 : vector<8x128xi32>
    %cst_33 = arith.constant 1.000000e+00 : f32
    %cst_34 = arith.constant 5.000000e+00 : f32
    %76 = vector.broadcast %cst_33 : f32 to vector<8x128xf32>
    %77 = vector.broadcast %cst_34 : f32 to vector<8x128xf32>
    %78 = arith.select %75, %76, %77 : vector<8x128xi1>, vector<8x128xf32>
    %cst_35 = arith.constant 1.000000e+00 : f32
    %79 = vector.broadcast %cst_35 : f32 to vector<8x128xf32>
    %80 = arith.addf %79, %70 : vector<8x128xf32>
    %81 = arith.mulf %69, %69 : vector<8x128xf32>
    %82 = arith.subf %80, %81 : vector<8x128xf32>
    %83 = math.exp %70 : vector<8x128xf32>
    %84 = arith.subf %82, %83 : vector<8x128xf32>
    %cst_36 = arith.constant -5.000000e-01 : f32
    %85 = vector.broadcast %cst_36 : f32 to vector<8x128xf32>
    %86 = arith.mulf %85, %84 : vector<8x128xf32>
    %87 = arith.mulf %78, %86 : vector<8x128xf32>
    %88 = arith.addf %68, %87 : vector<8x128xf32>
    %c0_37 = arith.constant 0 : index
    %c512 = arith.constant 512 : index
    %89 = vector.load %arg1[%c0_37, %c512] : memref<8x896xf32, #tpu.memory_space<vmem>>, vector<8x128xf32>
    %c0_38 = arith.constant 0 : index
    %c512_39 = arith.constant 512 : index
    %90 = vector.load %arg2[%c0_38, %c512_39] : memref<8x768xf32, #tpu.memory_space<vmem>>, vector<8x128xf32>
    %cst_40 = arith.constant dense<0xFF800000> : vector<8xf32>
    %91 = vector.multi_reduction <maximumf>, %89, %cst_40 [1] : vector<8x128xf32> to vector<8xf32>
    %92 = vector.shape_cast %91 : vector<8xf32> to vector<8x1xf32>
    %93 = vector.broadcast %92 : vector<8x1xf32> to vector<8x128xf32>
    %94 = arith.subf %89, %93 : vector<8x128xf32>
    %95 = math.exp %94 : vector<8x128xf32>
    %cst_41 = arith.constant dense<0.000000e+00> : vector<8xf32>
    %96 = vector.multi_reduction <add>, %95, %cst_41 [1] : vector<8x128xf32> to vector<8xf32>
    %97 = vector.shape_cast %96 : vector<8xf32> to vector<8x1xf32>
    %98 = math.log %97 : vector<8x1xf32>
    %99 = arith.addf %98, %92 : vector<8x1xf32>
    %100 = vector.broadcast %99 : vector<8x1xf32> to vector<8x128xf32>
    %101 = arith.subf %100, %89 : vector<8x128xf32>
    %102 = arith.mulf %90, %101 : vector<8x128xf32>
    %103 = arith.addf %88, %102 : vector<8x128xf32>
    %c0_42 = arith.constant 0 : index
    %c640 = arith.constant 640 : index
    %104 = vector.load %arg1[%c0_42, %c640] : memref<8x896xf32, #tpu.memory_space<vmem>>, vector<8x128xf32>
    %c0_43 = arith.constant 0 : index
    %c640_44 = arith.constant 640 : index
    %105 = vector.load %arg2[%c0_43, %c640_44] : memref<8x768xf32, #tpu.memory_space<vmem>>, vector<8x128xf32>
    %cst_45 = arith.constant dense<0xFF800000> : vector<8xf32>
    %106 = vector.multi_reduction <maximumf>, %104, %cst_45 [1] : vector<8x128xf32> to vector<8xf32>
    %107 = vector.shape_cast %106 : vector<8xf32> to vector<8x1xf32>
    %108 = vector.broadcast %107 : vector<8x1xf32> to vector<8x128xf32>
    %109 = arith.subf %104, %108 : vector<8x128xf32>
    %110 = math.exp %109 : vector<8x128xf32>
    %cst_46 = arith.constant dense<0.000000e+00> : vector<8xf32>
    %111 = vector.multi_reduction <add>, %110, %cst_46 [1] : vector<8x128xf32> to vector<8xf32>
    %112 = vector.shape_cast %111 : vector<8xf32> to vector<8x1xf32>
    %113 = math.log %112 : vector<8x1xf32>
    %114 = arith.addf %113, %107 : vector<8x1xf32>
    %115 = vector.broadcast %114 : vector<8x1xf32> to vector<8x128xf32>
    %116 = arith.subf %115, %104 : vector<8x128xf32>
    %117 = arith.mulf %105, %116 : vector<8x128xf32>
    %118 = arith.addf %103, %117 : vector<8x128xf32>
    %c0_47 = arith.constant 0 : index
    %c768 = arith.constant 768 : index
    %119 = vector.load %arg1[%c0_47, %c768] : memref<8x896xf32, #tpu.memory_space<vmem>>, vector<8x128xf32>
    %c16_i32_48 = arith.constant 16 : i32
    %120 = tpu.dynamic_rotate %119 by %c16_i32_48 dim 1 : vector<8x128xf32>, i32 -> vector<8x128xf32>
    %121 = arith.addf %119, %120 : vector<8x128xf32>
    %c112_i32 = arith.constant 112 : i32
    %122 = tpu.dynamic_rotate %119 by %c112_i32 dim 1 : vector<8x128xf32>, i32 -> vector<8x128xf32>
    %123 = arith.addf %121, %122 : vector<8x128xf32>
    %c32_i32 = arith.constant 32 : i32
    %124 = tpu.dynamic_rotate %119 by %c32_i32 dim 1 : vector<8x128xf32>, i32 -> vector<8x128xf32>
    %125 = arith.addf %123, %124 : vector<8x128xf32>
    %c96_i32 = arith.constant 96 : i32
    %126 = tpu.dynamic_rotate %119 by %c96_i32 dim 1 : vector<8x128xf32>, i32 -> vector<8x128xf32>
    %127 = arith.addf %125, %126 : vector<8x128xf32>
    %cst_49 = arith.constant 0.333333343 : f32
    %128 = vector.broadcast %cst_49 : f32 to vector<8x128xf32>
    %129 = arith.mulf %127, %128 : vector<8x128xf32>
    %130 = tpu.iota {dimensions = array<i32: 1>} : vector<8x128xi32>
    %c48_i32 = arith.constant 48 : i32
    %131 = vector.broadcast %c48_i32 : i32 to vector<8x128xi32>
    %132 = arith.cmpi slt, %130, %131 : vector<8x128xi32>
    %133 = arith.subf %119, %129 : vector<8x128xf32>
    %cst_50 = arith.constant 0.000000e+00 : f32
    %134 = vector.broadcast %cst_50 : f32 to vector<8x128xf32>
    %135 = arith.select %132, %133, %134 : vector<8x128xi1>, vector<8x128xf32>
    %cst_51 = arith.constant 5.000000e+01 : f32
    %136 = vector.broadcast %cst_51 : f32 to vector<8x128xf32>
    %137 = arith.mulf %136, %135 : vector<8x128xf32>
    %138 = arith.mulf %137, %135 : vector<8x128xf32>
    %139 = arith.addf %118, %138 : vector<8x128xf32>
    %c0_52 = arith.constant 0 : index
    %c0_53 = arith.constant 0 : index
    %140 = vector.load %arg4[%c0_52, %c0_53] : memref<8x128xf32, #tpu.memory_space<vmem>>, vector<8x128xf32>
    tpu.vector_store %arg4[%c0_52, %c0_53], %139 {strides = array<i32>} : memref<8x128xf32, #tpu.memory_space<vmem>>, vector<8x128xf32>,
    return
  }
  func.func @transform_0(%arg0: i32) -> (i32, i32) {
    %c0_i32 = arith.constant 0 : i32
    %c0_i32_0 = arith.constant 0 : i32
    return %arg0, %c0_i32 : i32, i32
  }
  func.func @transform_1(%arg0: i32) -> (i32, i32) {
    %c0_i32 = arith.constant 0 : i32
    %c0_i32_0 = arith.constant 0 : i32
    return %arg0, %c0_i32 : i32, i32
  }
  func.func @transform_2(%arg0: i32) -> (i32, i32) {
    %c0_i32 = arith.constant 0 : i32
    %c0_i32_0 = arith.constant 0 : i32
    return %arg0, %c0_i32 : i32, i32
  }
  func.func @transform_3(%arg0: i32) -> (i32, i32) {
    %c0_i32 = arith.constant 0 : i32
    %c0_i32_0 = arith.constant 0 : i32
    return %arg0, %c0_i32 : i32, i32
  }
}

</mosaic_0001>

<llo_original>
// kernel: tpu_custom_call.1
$region0: #{tpu_custom_call.1}
  #allocation0 [shape = 'u32[]', space=smem, size = 0x4, offset = 0x4, fixed_abs, tag = 'smem constant byte address 0x4 - core index']
  #allocation1 [shape = 'u32[144,128]{1,0:T(1,128)}', space=vmem, size = 0x12000, scoped, tag = 'internal scratch']
  %s0 = inlined_call_operand.hbm [shape: f32[8,896], index: 0, kind: input, shape index: {}]
  %s1 = inlined_call_operand.hbm [shape: f32[8,768], index: 1, kind: input, shape index: {}]
  %s2 = inlined_call_operand.hbm [shape: f32[8,256], index: 2, kind: input, shape index: {}]
  %s3 = inlined_call_operand.hbm [shape: f32[8,128], index: 3, kind: output, shape index: {}]
  %s4 = sld [smem:[#allocation0]]
  $region34: #{tpu_custom_call.1} parent=0
    _
  %s6 = ssub.s32 1, %s4
  %s7 = scalar_select 0, %s6, %s4
  $region1: #{tpu_custom_call.1} parent=0
    #allocation2 [shape = 'u8[28672]{0}', space=vmem, size = 0x7000, scoped, tag = 'input window, operand 0, single buffered']
    #allocation3 [shape = 's32[1]{0}', space=sflag, size = 0x4, scoped, tag = 'scoped memory for tpu_custom_call.1']
    #allocation4 [shape = 's32[1]{0}', space=sflag, size = 0x4, scoped, tag = 'scoped memory for tpu_custom_call.1']
    #allocation5 [shape = 'u8[24576]{0}', space=vmem, size = 0x6000, scoped, tag = 'input window, operand 1, single buffered']
    #allocation6 [shape = 's32[1]{0}', space=sflag, size = 0x4, scoped, tag = 'scoped memory for tpu_custom_call.1']
    #allocation7 [shape = 'u8[8192]{0}', space=vmem, size = 0x2000, scoped, tag = 'input window, operand 2, single buffered']
    #allocation8 [shape = 'u8[4096]{0}', space=vmem, size = 0x1000, scoped, tag = 'output window, operand 0, single buffered']
    %8 = vsyncpa [#allocation3], 0
    %9 = vsyncpa [#allocation6], 0
    %10 = vsyncpa [#allocation4], 0
    // Predicated region
    $region2: #{tpu_custom_call.1} parent=1 // pred_check
      _
    $region3: #{tpu_custom_call.1} parent=1 // pred_check_branch
      %12 = sbr.rel (0) target = $region5
    $region4: #{tpu_custom_call.1} parent=1 // pred_region
      %s14 = ssub.s32 896, 896
      %15 = vsyncadd [#allocation3], %s14
      %s17 = sshll.u32 [#allocation2], 4
      %s18 = int_to_ptr.vmem [resolvable:$true] %s17
      %20 = dma.hbm_to_vmem [thread:$0]  %s0, 896, %s18, [#allocation3]
    $region5: #{tpu_custom_call.1} parent=1 // pred_fallthru
      _
    // Predicated region
    $region6: #{tpu_custom_call.1} parent=1 // pred_check
      _
    $region7: #{tpu_custom_call.1} parent=1 // pred_check_branch
      %22 = sbr.rel (0) target = $region9
    $region8: #{tpu_custom_call.1} parent=1 // pred_region
      %s24 = ssub.s32 768, 768
      %25 = vsyncadd [#allocation6], %s24
      %s27 = sshll.u32 [#allocation5], 4
      %s28 = int_to_ptr.vmem [resolvable:$true] %s27
      %30 = dma.hbm_to_vmem [thread:$0]  %s1, 768, %s28, [#allocation6]
    $region9: #{tpu_custom_call.1} parent=1 // pred_fallthru
      _
    // Predicated region
    $region10: #{tpu_custom_call.1} parent=1 // pred_check
      _
    $region11: #{tpu_custom_call.1} parent=1 // pred_check_branch
      %32 = sbr.rel (0) target = $region13
    $region12: #{tpu_custom_call.1} parent=1 // pred_region
      %s34 = ssub.s32 256, 256
      %35 = vsyncadd [#allocation6], %s34
      %s37 = sshll.u32 [#allocation7], 4
      %s38 = int_to_ptr.vmem [resolvable:$true] %s37
      %40 = dma.hbm_to_vmem [thread:$0]  %s2, 256, %s38, [#allocation6]
    $region13: #{tpu_custom_call.1} parent=1 // pred_fallthru
      _
    // Predicated region
    $region14: #{tpu_custom_call.1} parent=1 // pred_check
      _
    $region15: #{tpu_custom_call.1} parent=1 // pred_check_branch
      %42 = sbr.rel (0) target = $region17
    $region16: #{tpu_custom_call.1} parent=1 // pred_region
      %43 = dma.done [#allocation3], 896
    $region17: #{tpu_custom_call.1} parent=1 // pred_fallthru
      _
    // Predicated region
    $region18: #{tpu_custom_call.1} parent=1 // pred_check
      _
    $region19: #{tpu_custom_call.1} parent=1 // pred_check_branch
      %45 = sbr.rel (0) target = $region21
    $region20: #{tpu_custom_call.1} parent=1 // pred_region
      %46 = dma.done [#allocation6], 768
    $region21: #{tpu_custom_call.1} parent=1 // pred_fallthru
      _
    // Predicated region
    $region22: #{tpu_custom_call.1} parent=1 // pred_check
      _
    $region23: #{tpu_custom_call.1} parent=1 // pred_check_branch
      %48 = sbr.rel (0) target = $region25
    $region24: #{tpu_custom_call.1} parent=1 // pred_region
      %49 = dma.done [#allocation6], 256
    $region25: #{tpu_custom_call.1} parent=1 // pred_fallthru
      _
    %v50 = vld [vmem:[#allocation2] sm:$0xff]
    %v51 = vld [vmem:[#allocation5] sm:$0xff]
    %v52 = vld [vmem:[#allocation7] sm:$0xff]
    %v53 = vmul.f32 %v50, 1.442695
    %v54 = vpow.pop %v53
    %v55 = vmul.f32 %v51, %v50
    %v56 = vsub.f32 %v54, %v55
    %vm57 = vcmp.gt.f32.partialorder %v51, 1.0
    %v58 = vsel %vm57, %v51, 2.0
    %v59 = vlog2.pop %v58
    %v60 = vmul.f32 %v59, 0.6931472
    %v61 = vmul.f32 %v58, %v60
    %v62 = vsub.f32 %v61, %v58
    %v63 = vadd.f32 %v60, 1.837877
    %v64 = vmul.f32 %v63, 0.5
    %v65 = vadd.f32 %v62, %v64
    %v66 = vsel %vm57, %v65, 0.0
    %v67 = vadd.f32 %v56, %v66
    %v68 = vmul.f32 %v52, %v67
    %v69 = vadd.f32 %v68, 0.0
    %v70 = vld [vmem:[#allocation2 + $0x8] sm:$0xff]
    %v71 = vld [vmem:[#allocation5 + $0x8] sm:$0xff]
    %v72 = vld [vmem:[#allocation7 + $0x8] sm:$0xff]
    %v73 = vmul.f32 %v70, 1.442695
    %v74 = vpow.pop %v73
    %v75 = vmul.f32 %v71, %v70
    %v76 = vsub.f32 %v74, %v75
    %vm77 = vcmp.gt.f32.partialorder %v71, 1.0
    %v78 = vsel %vm77, %v71, 2.0
    %v79 = vlog2.pop %v78
    %v80 = vmul.f32 %v79, 0.6931472
    %v81 = vmul.f32 %v78, %v80
    %v82 = vsub.f32 %v81, %v78
    %v83 = vadd.f32 %v80, 1.837877
    %v84 = vmul.f32 %v83, 0.5
    %v85 = vadd.f32 %v82, %v84
    %v86 = vsel %vm77, %v85, 0.0
    %v87 = vadd.f32 %v76, %v86
    %v88 = vmul.f32 %v72, %v87
    %v89 = vadd.f32 %v69, %v88
    %v90 = vld [vmem:[#allocation2 + $0x10] sm:$0xff]
    %v91 = vld [vmem:[#allocation5 + $0x10] sm:$0xff]
    %v92 = vlog2.pop %v90
    %v93 = vmul.f32 %v92, 0.6931472
    %v94 = vmax.f32 %v93, -100.0
    %v95 = vsub.f32 0.0, %v90
    %v96 = vadd.f32 %v95, 1.0
    %v97 = vlog2.pop %v96
    %v98 = vmul.f32 %v97, 0.6931472
    %v99 = vmul.f32 -0.5, %v95
    %v100 = vadd.f32 %v99, 1.0
    %v101 = vmul.f32 %v100, %v95
    %v102 = vand.u32 2147483647, %v95
    %vm103 = vcmp.lt.f32.partialorder %v102, 0.0004427343
    %v104 = vsel %vm103, %v101, %v98
    %v105 = vmax.f32 %v104, -100.0
    %v106 = vmul.f32 %v91, %v94
    %v107 = vsub.f32 1.0, %v91
    %v108 = vmul.f32 %v107, %v105
    %v109 = vadd.f32 %v106, %v108
    %v110 = vsub.f32 0.0, %v109
    %v111 = vadd.f32 %v89, %v110
    %v112 = vld [vmem:[#allocation2 + $0x18] sm:$0xff]
    %v113 = vld [vmem:[#allocation5 + $0x18] sm:$0xff]
    %v114 = vlaneseq
    %v115 = vand.u32 %v114, 127
    %vm116 = vcmp.lt.s32.totalorder %v115, 16
    %v117 = vsel %vm116, 1.0, 5.0
    %v118 = vadd.f32 %v113, 1.0
    %v119 = vmul.f32 %v112, %v112
    %v120 = vsub.f32 %v118, %v119
    %v121 = vmul.f32 %v113, 1.442695
    %v122 = vpow.pop %v121
    %v123 = vsub.f32 %v120, %v122
    %v124 = vmul.f32 %v123, -0.5
    %v125 = vmul.f32 %v117, %v124
    %v126 = vadd.f32 %v111, %v125
    %v127 = vld [vmem:[#allocation2 + $0x20] sm:$0xff]
    %v128 = vld [vmem:[#allocation5 + $0x20] sm:$0xff]
    %129 = vmax.xlane.f32.xlu0 %v127
    %v130 = vpop.xlane.xlu0 %129
    %v131 = vsub.f32 %v127, %v130
    %v132 = vmul.f32 %v131, 1.442695
    %v133 = vpow.pop %v132
    %134 = vadd.xlane.f32.xlu0 %v133
    %v135 = vpop.xlane.xlu0 %134
    %v136 = vlog2.pop %v135
    %v137 = vmul.f32 %v136, 0.6931472
    %v138 = vadd.f32 %v137, %v130
    %v139 = vsub.f32 %v138, %v127
    %v140 = vmul.f32 %v128, %v139
    %v141 = vadd.f32 %v126, %v140
    %v142 = vld [vmem:[#allocation2 + $0x28] sm:$0xff]
    %v143 = vld [vmem:[#allocation5 + $0x28] sm:$0xff]
    %144 = vmax.xlane.f32.xlu0 %v142
    %v145 = vpop.xlane.xlu0 %144
    %v146 = vsub.f32 %v142, %v145
    %v147 = vmul.f32 %v146, 1.442695
    %v148 = vpow.pop %v147
    %149 = vadd.xlane.f32.xlu0 %v148
    %v150 = vpop.xlane.xlu0 %149
    %v151 = vlog2.pop %v150
    %v152 = vmul.f32 %v151, 0.6931472
    %v153 = vadd.f32 %v152, %v145
    %v154 = vsub.f32 %v153, %v142
    %v155 = vmul.f32 %v143, %v154
    %v156 = vadd.f32 %v141, %v155
    %v157 = vld [vmem:[#allocation2 + $0x30] sm:$0xff]
    %158 = vrot.lane.b32.xlu0 %v157, 16
    %v159 = vpop.permute.xlu0 %158
    %v160 = vadd.f32 %v157, %v159
    %161 = vrot.lane.b32.xlu0 %v157, 112
    %v162 = vpop.permute.xlu0 %161
    %v163 = vadd.f32 %v160, %v162
    %164 = vrot.lane.b32.xlu0 %v157, 32
    %v165 = vpop.permute.xlu0 %164
    %v166 = vadd.f32 %v163, %v165
    %167 = vrot.lane.b32.xlu0 %v157, 96
    %v168 = vpop.permute.xlu0 %167
    %v169 = vadd.f32 %v166, %v168
    %v170 = vmul.f32 %v169, 0.33333334
    %vm171 = vcmp.lt.s32.totalorder %v115, 48
    %v172 = vsub.f32 %v157, %v170
    %v173 = vsel %vm171, %v172, 0.0
    %v174 = vmul.f32 %v173, 50.0
    %v175 = vmul.f32 %v174, %v173
    %v176 = vadd.f32 %v156, %v175
    %177 = vst [vmem:[#allocation8] sm:$0xff] %v176
    // Predicated region
    $region26: #{tpu_custom_call.1} parent=1 // pred_check
      _
    $region27: #{tpu_custom_call.1} parent=1 // pred_check_branch
      %179 = sbr.rel (0) target = $region29
    $region28: #{tpu_custom_call.1} parent=1 // pred_region
      %s181 = ssub.s32 128, 128
      %182 = vsyncadd [#allocation4], %s181
      %s184 = sshll.u32 [#allocation8], 4
      %s185 = int_to_ptr.vmem [resolvable:$true] %s184
      %187 = dma.vmem_to_hbm [thread:$0]  %s185, 128, %s3, [#allocation4]
    $region29: #{tpu_custom_call.1} parent=1 // pred_fallthru
      _
    // Predicated region
    $region30: #{tpu_custom_call.1} parent=1 // pred_check
      _
    $region31: #{tpu_custom_call.1} parent=1 // pred_check_branch
      %189 = sbr.rel (0) target = $region33
    $region32: #{tpu_custom_call.1} parent=1 // pred_region
      %190 = dma.done [#allocation4], 128
    $region33: #{tpu_custom_call.1} parent=1 // pred_fallthru
      _
    %191 = vsyncpa [#allocation3], 1
    %192 = vsyncpa [#allocation6], 1
    %193 = vsyncpa [#allocation4], 1

</llo_original>
